<compile_context>
chip_gen: v7x
topology: tpu7x:2x2x1
jax: 0.10.0
libtpu: 0.0.40
codegen_flags: <defaults>
</compile_context>

<pallas_src>
import functools
import math

import jax
import jax.numpy as jnp
from jax.experimental import pallas as pl
from jax.experimental.pallas import tpu as pltpu


# ----------------------------------------------------------------------------
# Fast bounded-range sine (VPU-only, ~3.5 ulp over the reduced range).
# Valid for the non-negative, moderately bounded arguments this module
# produces (<= max(H, W) + pi/2 unnormalized, <= scale + pi/2 normalized).
# ----------------------------------------------------------------------------
_INV_PI = 0.3183098861837907
_PI_A = 3.140625                      # head of pi, exact in 8 mantissa bits
_PI_B = 9.676535897932e-04            # pi - _PI_A
_S9 = 2.6083159809786593541503e-06    # SLEEF sinf_u35 coefficients
_S7 = -0.0001981069071916863322258
_S5 = 0.00833307858556509017944336
_S3 = -0.166666597127914428710938


def _fast_sin(x):
    """sin(x): Cody-Waite reduction to [-pi/2, pi/2] + degree-9 odd minimax."""
    k = jnp.floor(x * _INV_PI + 0.5)
    r = x - k * _PI_A
    r = r - k * _PI_B
    # sin(x) = (-1)^k * sin(r); sin is odd, so fold the sign into r.
    parity = k - 2.0 * jnp.floor(k * 0.5)          # k mod 2 in {0, 1}
    r = r * (1.0 - 2.0 * parity)
    r2 = r * r
    p = _S9
    p = p * r2 + _S7
    p = p * r2 + _S5
    p = p * r2 + _S3
    return r + r * (r2 * p)


# ----------------------------------------------------------------------------
# Kernel: expand row/col embeddings into interleaved sin/cos features.
# ----------------------------------------------------------------------------
def _sine_expand_kernel(C, yx_ref, coef_ref, out_ref):
    """yx_ref  : (1, 2, HWb) f32  -- row 0 = y_embed, row 1 = x_embed
    coef_ref: (2, C, 1)  f32  -- row 0 = 1/dim_t, row 1 = phase (0 or pi/2)
    out_ref : (1, 2C, HWb) f32 -- channels [0,C) = pos_y, [C,2C) = pos_x
    """
    y = yx_ref[0, 0:1, :]        # (1, HWb)
    x = yx_ref[0, 1:2, :]        # (1, HWb)
    inv = coef_ref[0]            # (C, 1)
    ph = coef_ref[1]             # (C, 1)

    # cos(a) = sin(a + pi/2): one transcendental per element.
    out_ref[0, 0:C, :] = _fast_sin(y * inv + ph)       # pos_y half
    out_ref[0, C:2 * C, :] = _fast_sin(x * inv + ph)   # pos_x half


def _pick_hw_block(hw, batch, max_lanes=2048, min_grid_steps=4):
    """Lane-tile size: multiple of 128, VMEM-bounded (<= max_lanes), and small
    enough that batch * num_tiles >= min_grid_steps so both v7x TensorCores
    get work.  Ragged last blocks are handled by Pallas masking."""
    if hw <= 128:
        return hw                                   # full extent: always legal
    n_chunks = pl.cdiv(hw, 128)                     # 128-lane chunks in HW
    blk_chunks = min(max_lanes // 128, n_chunks)
    while (batch * pl.cdiv(n_chunks, blk_chunks) < min_grid_steps
           and blk_chunks > 1):
        blk_chunks = pl.cdiv(blk_chunks, 2)
    return blk_chunks * 128


def position_embedding_sine(mask, num_pos_feats=64, temperature=10000.0,
                            normalize=False, scale=None):
    """mask: (B, 1, H, W) -> pos: (B, 2*num_pos_feats, H, W) float32."""
    if scale is not None and normalize is False:
        raise ValueError('normalize should be True if scale is passed')
    if scale is None:
        scale = 2 * math.pi
    scale = float(scale)

    m = jnp.squeeze(mask, axis=1).astype(jnp.float32)        # (B, H, W)
    B, H, W = m.shape
    C = int(num_pos_feats)
    HW = H * W

    # Tiny cumulative sums + normalization in plain JAX (mem-bound, negligible
    # vs. the 2C-times-larger output the kernel writes).
    y_embed = jnp.cumsum(m, axis=1)
    x_embed = jnp.cumsum(m, axis=2)
    if normalize:
        eps = 1e-06
        y_embed = y_embed / (y_embed[:, -1:, :] + eps) * scale
        x_embed = x_embed / (x_embed[:, :, -1:] + eps) * scale

    # Single merged spatial input: (B, 2, HW), row 0 = y, row 1 = x.
    yx = jnp.stack([y_embed.reshape(B, HW), x_embed.reshape(B, HW)], axis=1)

    # dim_t[c] = temperature ** (2*(c//2)/C); pass reciprocal + sin phase,
    # merged into one (2, C, 1) constant input.
    d = jnp.arange(C, dtype=jnp.float32)
    inv_dim_t = jnp.power(jnp.float32(temperature),
                          -2.0 * jnp.floor(d / 2.0) / C)
    phase = (d % 2.0) * (math.pi / 2.0)
    coef = jnp.stack([inv_dim_t, phase], axis=0).reshape(2, C, 1)
    coef = coef.astype(jnp.float32)

    hw_blk = _pick_hw_block(HW, B)
    grid = (B, pl.cdiv(HW, hw_blk))

    out = pl.pallas_call(
        functools.partial(_sine_expand_kernel, C),
        out_shape=jax.ShapeDtypeStruct((B, 2 * C, HW), jnp.float32),
        grid_spec=pltpu.PrefetchScalarGridSpec(
            num_scalar_prefetch=0,
            grid=grid,
            in_specs=[
                pl.BlockSpec((1, 2, hw_blk), lambda b, t: (b, 0, t)),
                pl.BlockSpec((2, C, 1), lambda b, t: (0, 0, 0)),
            ],
            out_specs=pl.BlockSpec((1, 2 * C, hw_blk), lambda b, t: (b, 0, t)),
        ),
        compiler_params=pltpu.CompilerParams(
            dimension_semantics=("parallel", "parallel")),
    )(yx, coef)

    # (B, 2C, H*W) -> (B, 2C, H, W): layout-preserving reshape, no transpose.
    return out.reshape(B, 2 * C, H, W)


# ----------------------------------------------------------------------------
# Plain-JAX reference mirroring the PyTorch forward (uses jnp.sin / jnp.cos).
# ----------------------------------------------------------------------------
def _reference(mask, num_pos_feats=64, temperature=10000.0,
               normalize=False, scale=None):
    if scale is None:
        scale = 2 * math.pi
    m = jnp.squeeze(mask, axis=1).astype(jnp.float32)
    y_embed = jnp.cumsum(m, axis=1)
    x_embed = jnp.cumsum(m, axis=2)
    if normalize:
        eps = 1e-06
        y_embed = y_embed / (y_embed[:, -1:, :] + eps) * scale
        x_embed = x_embed / (x_embed[:, :, -1:] + eps) * scale
    d = jnp.arange(num_pos_feats, dtype=jnp.float32)
    dim_t = temperature ** (2.0 * jnp.floor(d / 2.0) / num_pos_feats)
    pos_x = x_embed[:, :, :, None] / dim_t
    pos_y = y_embed[:, :, :, None] / dim_t
    pos_x = jnp.stack((jnp.sin(pos_x[:, :, :, 0::2]),
                       jnp.cos(pos_x[:, :, :, 1::2])), axis=4).reshape(
                           *pos_x.shape[:3], -1)
    pos_y = jnp.stack((jnp.sin(pos_y[:, :, :, 0::2]),
                       jnp.cos(pos_y[:, :, :, 1::2])), axis=4).reshape(
                           *pos_y.shape[:3], -1)
    pos = jnp.concatenate((pos_y, pos_x), axis=3)
    return jnp.transpose(pos, (0, 3, 1, 2))


if __name__ == "__main__":
    num_pos_feats = 64

    # Case 1: default (normalize=False), HW divisible by 128.
    key = jax.random.PRNGKey(0)
    B, H, W = 2, 16, 16
    mask = (jax.random.uniform(key, (B, 1, H, W)) > 0.3).astype(jnp.float32)
    pos = jax.block_until_ready(
        position_embedding_sine(mask, num_pos_feats=num_pos_feats))
    assert pos.shape == (B, 2 * num_pos_feats, H, W), pos.shape
    ref = _reference(mask, num_pos_feats=num_pos_feats)
    err = float(jnp.max(jnp.abs(pos - ref)))
    assert err < 1e-4, err

    # Case 2: normalize=True.
    pos_n = jax.block_until_ready(
        position_embedding_sine(mask, num_pos_feats=num_pos_feats,
                                normalize=True))
    ref_n = _reference(mask, num_pos_feats=num_pos_feats, normalize=True)
    err_n = float(jnp.max(jnp.abs(pos_n - ref_n)))
    assert err_n < 1e-4, err_n

    # Case 3: ragged spatial extent (HW not a multiple of 128) to exercise the
    # masked edge-block path.
    key2 = jax.random.PRNGKey(1)
    B2, H2, W2 = 2, 12, 17   # HW = 204
    mask2 = (jax.random.uniform(key2, (B2, 1, H2, W2)) > 0.3).astype(
        jnp.float32)
    pos2 = jax.block_until_ready(
        position_embedding_sine(mask2, num_pos_feats=num_pos_feats,
                                normalize=True))
    ref2 = _reference(mask2, num_pos_feats=num_pos_feats, normalize=True)
    err2 = float(jnp.max(jnp.abs(pos2 - ref2)))
    assert err2 < 1e-4, err2

    print("KERNEL_OK")
</pallas_src>

<mosaic_0001>
module attributes {stable_mosaic.version = 11 : i64} {
  func.func @_sine_expand_kernel(%arg0: i32, %arg1: i32, %arg2: memref<1x2x128xf32, #tpu.memory_space<vmem>>, %arg3: memref<2x64x1xf32, #tpu.memory_space<vmem>>, %arg4: memref<1x128x128xf32, #tpu.memory_space<vmem>>) attributes {dimension_semantics = [#tpu.dimension_semantics<parallel>, #tpu.dimension_semantics<parallel>], iteration_bounds = array<i64: 2, 2>, scalar_prefetch = 0 : i64, scratch_operands = 0 : i64, tpu.core_type = #tpu.core_type<tc>, window_params = [{transform_indices = @transform_0, window_bounds = array<i64: 1, 2, 128>}, {pipeline_mode = #tpu.pipeline_mode<synchronous>, transform_indices = @transform_1, window_bounds = array<i64: 2, 64, 1>}, {transform_indices = @transform_2, window_bounds = array<i64: 1, 128, 128>}]} {
    %c0 = arith.constant 0 : index
    %c0_0 = arith.constant 0 : index
    %c0_1 = arith.constant 0 : index
    %0 = vector.load %arg2[%c0, %c0_0, %c0_1] : memref<1x2x128xf32, #tpu.memory_space<vmem>>, vector<1x1x128xf32>
    %1 = vector.shape_cast %0 : vector<1x1x128xf32> to vector<1x128xf32>
    %c0_2 = arith.constant 0 : index
    %c1 = arith.constant 1 : index
    %c0_3 = arith.constant 0 : index
    %2 = vector.load %arg2[%c0_2, %c1, %c0_3] : memref<1x2x128xf32, #tpu.memory_space<vmem>>, vector<1x1x128xf32>
    %3 = vector.shape_cast %2 : vector<1x1x128xf32> to vector<1x128xf32>
    %c0_4 = arith.constant 0 : index
    %c0_5 = arith.constant 0 : index
    %c0_6 = arith.constant 0 : index
    %4 = vector.load %arg3[%c0_4, %c0_5, %c0_6] : memref<2x64x1xf32, #tpu.memory_space<vmem>>, vector<1x64x1xf32>
    %5 = vector.shape_cast %4 : vector<1x64x1xf32> to vector<64x1xf32>
    %c1_7 = arith.constant 1 : index
    %c0_8 = arith.constant 0 : index
    %c0_9 = arith.constant 0 : index
    %6 = vector.load %arg3[%c1_7, %c0_8, %c0_9] : memref<2x64x1xf32, #tpu.memory_space<vmem>>, vector<1x64x1xf32>
    %7 = vector.shape_cast %6 : vector<1x64x1xf32> to vector<64x1xf32>
    %8 = vector.broadcast %1 : vector<1x128xf32> to vector<64x128xf32>
    %9 = vector.broadcast %5 : vector<64x1xf32> to vector<64x128xf32>
    %10 = arith.mulf %8, %9 : vector<64x128xf32>
    %11 = vector.broadcast %7 : vector<64x1xf32> to vector<64x128xf32>
    %12 = arith.addf %10, %11 : vector<64x128xf32>
    %cst = arith.constant 0.318309873 : f32
    %13 = vector.broadcast %cst : f32 to vector<64x128xf32>
    %14 = arith.mulf %12, %13 : vector<64x128xf32>
    %cst_10 = arith.constant 5.000000e-01 : f32
    %15 = vector.broadcast %cst_10 : f32 to vector<64x128xf32>
    %16 = arith.addf %14, %15 : vector<64x128xf32>
    %17 = math.floor %16 : vector<64x128xf32>
    %cst_11 = arith.constant 3.140625 : f32
    %18 = vector.broadcast %cst_11 : f32 to vector<64x128xf32>
    %19 = arith.mulf %17, %18 : vector<64x128xf32>
    %20 = arith.subf %12, %19 : vector<64x128xf32>
    %cst_12 = arith.constant 9.67653584E-4 : f32
    %21 = vector.broadcast %cst_12 : f32 to vector<64x128xf32>
    %22 = arith.mulf %17, %21 : vector<64x128xf32>
    %23 = arith.subf %20, %22 : vector<64x128xf32>
    %cst_13 = arith.constant 5.000000e-01 : f32
    %24 = vector.broadcast %cst_13 : f32 to vector<64x128xf32>
    %25 = arith.mulf %17, %24 : vector<64x128xf32>
    %26 = math.floor %25 : vector<64x128xf32>
    %cst_14 = arith.constant 2.000000e+00 : f32
    %27 = vector.broadcast %cst_14 : f32 to vector<64x128xf32>
    %28 = arith.mulf %27, %26 : vector<64x128xf32>
    %29 = arith.subf %17, %28 : vector<64x128xf32>
    %cst_15 = arith.constant 2.000000e+00 : f32
    %30 = vector.broadcast %cst_15 : f32 to vector<64x128xf32>
    %31 = arith.mulf %30, %29 : vector<64x128xf32>
    %cst_16 = arith.constant 1.000000e+00 : f32
    %32 = vector.broadcast %cst_16 : f32 to vector<64x128xf32>
    %33 = arith.subf %32, %31 : vector<64x128xf32>
    %34 = arith.mulf %23, %33 : vector<64x128xf32>
    %35 = arith.mulf %34, %34 : vector<64x128xf32>
    %cst_17 = arith.constant 2.60831598E-6 : f32
    %36 = vector.broadcast %cst_17 : f32 to vector<64x128xf32>
    %37 = arith.mulf %36, %35 : vector<64x128xf32>
    %cst_18 = arith.constant -1.98106907E-4 : f32
    %38 = vector.broadcast %cst_18 : f32 to vector<64x128xf32>
    %39 = arith.addf %37, %38 : vector<64x128xf32>
    %40 = arith.mulf %39, %35 : vector<64x128xf32>
    %cst_19 = arith.constant 0.00833307859 : f32
    %41 = vector.broadcast %cst_19 : f32 to vector<64x128xf32>
    %42 = arith.addf %40, %41 : vector<64x128xf32>
    %43 = arith.mulf %42, %35 : vector<64x128xf32>
    %cst_20 = arith.constant -0.166666597 : f32
    %44 = vector.broadcast %cst_20 : f32 to vector<64x128xf32>
    %45 = arith.addf %43, %44 : vector<64x128xf32>
    %46 = arith.mulf %35, %45 : vector<64x128xf32>
    %47 = arith.mulf %34, %46 : vector<64x128xf32>
    %48 = arith.addf %34, %47 : vector<64x128xf32>
    %c0_21 = arith.constant 0 : index
    %c0_22 = arith.constant 0 : index
    %c0_23 = arith.constant 0 : index
    %49 = vector.load %arg4[%c0_21, %c0_22, %c0_23] : memref<1x128x128xf32, #tpu.memory_space<vmem>>, vector<1x64x128xf32>
    %50 = vector.shape_cast %49 : vector<1x64x128xf32> to vector<64x128xf32>
    %51 = vector.shape_cast %48 : vector<64x128xf32> to vector<1x64x128xf32>
    tpu.vector_store %arg4[%c0_21, %c0_22, %c0_23], %51 {strides = array<i32>} : memref<1x128x128xf32, #tpu.memory_space<vmem>>, vector<1x64x128xf32>,
    %52 = vector.broadcast %3 : vector<1x128xf32> to vector<64x128xf32>
    %53 = vector.broadcast %5 : vector<64x1xf32> to vector<64x128xf32>
    %54 = arith.mulf %52, %53 : vector<64x128xf32>
    %55 = vector.broadcast %7 : vector<64x1xf32> to vector<64x128xf32>
    %56 = arith.addf %54, %55 : vector<64x128xf32>
    %cst_24 = arith.constant 0.318309873 : f32
    %57 = vector.broadcast %cst_24 : f32 to vector<64x128xf32>
    %58 = arith.mulf %56, %57 : vector<64x128xf32>
    %cst_25 = arith.constant 5.000000e-01 : f32
    %59 = vector.broadcast %cst_25 : f32 to vector<64x128xf32>
    %60 = arith.addf %58, %59 : vector<64x128xf32>
    %61 = math.floor %60 : vector<64x128xf32>
    %cst_26 = arith.constant 3.140625 : f32
    %62 = vector.broadcast %cst_26 : f32 to vector<64x128xf32>
    %63 = arith.mulf %61, %62 : vector<64x128xf32>
    %64 = arith.subf %56, %63 : vector<64x128xf32>
    %cst_27 = arith.constant 9.67653584E-4 : f32
    %65 = vector.broadcast %cst_27 : f32 to vector<64x128xf32>
    %66 = arith.mulf %61, %65 : vector<64x128xf32>
    %67 = arith.subf %64, %66 : vector<64x128xf32>
    %cst_28 = arith.constant 5.000000e-01 : f32
    %68 = vector.broadcast %cst_28 : f32 to vector<64x128xf32>
    %69 = arith.mulf %61, %68 : vector<64x128xf32>
    %70 = math.floor %69 : vector<64x128xf32>
    %cst_29 = arith.constant 2.000000e+00 : f32
    %71 = vector.broadcast %cst_29 : f32 to vector<64x128xf32>
    %72 = arith.mulf %71, %70 : vector<64x128xf32>
    %73 = arith.subf %61, %72 : vector<64x128xf32>
    %cst_30 = arith.constant 2.000000e+00 : f32
    %74 = vector.broadcast %cst_30 : f32 to vector<64x128xf32>
    %75 = arith.mulf %74, %73 : vector<64x128xf32>
    %cst_31 = arith.constant 1.000000e+00 : f32
    %76 = vector.broadcast %cst_31 : f32 to vector<64x128xf32>
    %77 = arith.subf %76, %75 : vector<64x128xf32>
    %78 = arith.mulf %67, %77 : vector<64x128xf32>
    %79 = arith.mulf %78, %78 : vector<64x128xf32>
    %cst_32 = arith.constant 2.60831598E-6 : f32
    %80 = vector.broadcast %cst_32 : f32 to vector<64x128xf32>
    %81 = arith.mulf %80, %79 : vector<64x128xf32>
    %cst_33 = arith.constant -1.98106907E-4 : f32
    %82 = vector.broadcast %cst_33 : f32 to vector<64x128xf32>
    %83 = arith.addf %81, %82 : vector<64x128xf32>
    %84 = arith.mulf %83, %79 : vector<64x128xf32>
    %cst_34 = arith.constant 0.00833307859 : f32
    %85 = vector.broadcast %cst_34 : f32 to vector<64x128xf32>
    %86 = arith.addf %84, %85 : vector<64x128xf32>
    %87 = arith.mulf %86, %79 : vector<64x128xf32>
    %cst_35 = arith.constant -0.166666597 : f32
    %88 = vector.broadcast %cst_35 : f32 to vector<64x128xf32>
    %89 = arith.addf %87, %88 : vector<64x128xf32>
    %90 = arith.mulf %79, %89 : vector<64x128xf32>
    %91 = arith.mulf %78, %90 : vector<64x128xf32>
    %92 = arith.addf %78, %91 : vector<64x128xf32>
    %c0_36 = arith.constant 0 : index
    %c64 = arith.constant 64 : index
    %c0_37 = arith.constant 0 : index
    %93 = vector.load %arg4[%c0_36, %c64, %c0_37] : memref<1x128x128xf32, #tpu.memory_space<vmem>>, vector<1x64x128xf32>
    %94 = vector.shape_cast %93 : vector<1x64x128xf32> to vector<64x128xf32>
    %95 = vector.shape_cast %92 : vector<64x128xf32> to vector<1x64x128xf32>
    tpu.vector_store %arg4[%c0_36, %c64, %c0_37], %95 {strides = array<i32>} : memref<1x128x128xf32, #tpu.memory_space<vmem>>, vector<1x64x128xf32>,
    return
  }
  func.func @transform_0(%arg0: i32, %arg1: i32) -> (i32, i32, i32) {
    %c0_i32 = arith.constant 0 : i32
    %c0_i32_0 = arith.constant 0 : i32
    return %arg0, %c0_i32, %arg1 : i32, i32, i32
  }
  func.func @transform_1(%arg0: i32, %arg1: i32) -> (i32, i32, i32) {
    %c0_i32 = arith.constant 0 : i32
    %c0_i32_0 = arith.constant 0 : i32
    %c0_i32_1 = arith.constant 0 : i32
    %c0_i32_2 = arith.constant 0 : i32
    return %c0_i32, %c0_i32_0, %c0_i32_1 : i32, i32, i32
  }
  func.func @transform_2(%arg0: i32, %arg1: i32) -> (i32, i32, i32) {
    %c0_i32 = arith.constant 0 : i32
    %c0_i32_0 = arith.constant 0 : i32
    return %arg0, %c0_i32, %arg1 : i32, i32, i32
  }
}

</mosaic_0001>

<llo_original>
// kernel: tpu_custom_call.1
$region0: #{tpu_custom_call.1}
  #allocation0 [shape = 'u32[]', space=smem, size = 0x4, offset = 0x4, fixed_abs, tag = 'smem constant byte address 0x4 - core index']
  #allocation1 [shape = 'u32[144,128]{1,0:T(1,128)}', space=vmem, size = 0x12000, scoped, tag = 'internal scratch']
  %s0 = inlined_call_operand.vmem [shape: f32[2,2,256], index: 0, kind: input, shape index: {}]
  %s1 = inlined_call_operand.vmem [shape: f32[2,64,1], index: 1, kind: input, shape index: {}]
  %s2 = inlined_call_operand.hbm [shape: f32[2,128,256], index: 2, kind: output, shape index: {}]
  %s3 = sld [smem:[#allocation0]]
  $region41: #{tpu_custom_call.1} parent=0
    _
  %s5 = ssub.s32 1, %s3
  %s6 = scalar_select 0, %s5, %s3
  $region1: #{tpu_custom_call.1} parent=0
    #allocation2 [shape = 'u8[131072]{0}', space=vmem, size = 0x20000, scoped, tag = 'output window, operand 0']
    #allocation3 [shape = 's32[2]{0}', space=sflag, size = 0x8, scoped, tag = 'scoped memory for tpu_custom_call.1']
    %7 = vsyncpa [#allocation3], 0
    %s8 = scalar_lea.sflag [#allocation3], 1
    %9 = vsyncpa %s8, 0
    loop: start=0, step=1, limit=6
    $region2: #{tpu_custom_call.1} parent=1 // loop_pre_header
      _
    $region3: #{tpu_custom_call.1} parent=1 // loop_header
      %s11 = sphi 0, %s15
      %p12 = scmp.ge.s32.totalorder %s11, 6
      %s18 = sphi 0, %s30
      %s19 = sphi 0, %s26
      %s20 = sphi 0, %s18
      %s21 = sphi 0, %s19
      %s22 = sphi 0, %s20
      %s23 = sphi 0, %s21
      %s35 = sphi 0, %s37
      %s38 = sphi 0, %s35
      %s39 = sphi 0, %s38
      %s55 = sphi 0, %s39
      %s59 = sphi 0, %s59
      %s61 = sphi 0, %s59
      %s62 = sphi 0, %s61
      %s76 = sphi 0, %s62
      %s84 = sphi 0, %s86
      %s87 = sphi 0, %s84
      %s88 = sphi 0, %s87
      %s104 = sphi 0, %s88
    $region4: #{tpu_custom_call.1} parent=1 // loop_header_branch
      %14 = sbr.rel (%p12) target = $region8
    $region5: #{tpu_custom_call.1} parent=1 // loop_body
      %s16 = ssub.s32 %s11, 1
      %s17 = ssub.s32 %s11, 2
      %s24 = sadd.s32 1, %s19
      %p25 = scmp.ge.s32.totalorder %s24, 2
      %s26 = scalar_select %p25, 0, %s24
      %s27 = sadd.s32 1, %s18
      %s28 = scalar_select %p25, %s27, %s18
      %p29 = scmp.ge.s32.totalorder %s28, 2
      %s30 = scalar_select %p29, 0, %s28
      %s31 = ssub.s32 %s18, %s30
      %s32 = ssub.s32 %s19, %s26
      %s33 = sor.u32 %s31, %s32
      %p34 = scmp.eq.s32.totalorder %s33, 0
      %s36 = sadd.s32 %s35, 1
      %s37 = scalar_select %p34, %s35, %s36
      %p40 = pneg %p34
      %p41 = scmp.eq.s32.totalorder %s11, 3
      %p42 = por %p40, %p41
      %p43 = scmp.ne.s32.totalorder %s35, %s38
      %p44 = scmp.eq.s32.totalorder %s11, 0
      %p45 = por %p43, %p44
      %p46 = scmp.ne.s32.totalorder %s35, %s38
      %p47 = scmp.eq.s32.totalorder %s16, 3
      %p48 = por %p46, %p47
      %p49 = scmp.ne.s32.totalorder %s38, %s39
      %p50 = scmp.eq.s32.totalorder %s16, 0
      %p51 = por %p49, %p50
      %p52 = scmp.ne.s32.totalorder %s38, %s39
      %p53 = scmp.eq.s32.totalorder %s17, 3
      %p54 = por %p52, %p53
      %p56 = scmp.ne.s32.totalorder %s39, %s55
      %p57 = scmp.eq.s32.totalorder %s17, 0
      %p58 = por %p56, %p57
      %s60 = sadd.s32 %s59, 1
      %p63 = scmp.eq.s32.totalorder %s11, 3
      %p64 = scmp.ne.s32.totalorder %s59, %s61
      %p65 = scmp.eq.s32.totalorder %s11, 0
      %p66 = por %p64, %p65
      %p67 = scmp.ne.s32.totalorder %s59, %s61
      %p68 = scmp.eq.s32.totalorder %s16, 3
      %p69 = por %p67, %p68
      %p70 = scmp.ne.s32.totalorder %s61, %s62
      %p71 = scmp.eq.s32.totalorder %s16, 0
      %p72 = por %p70, %p71
      %p73 = scmp.ne.s32.totalorder %s61, %s62
      %p74 = scmp.eq.s32.totalorder %s17, 3
      %p75 = por %p73, %p74
      %p77 = scmp.ne.s32.totalorder %s62, %s76
      %p78 = scmp.eq.s32.totalorder %s17, 0
      %p79 = por %p77, %p78
      %s80 = ssub.s32 %s18, %s30
      %s81 = ssub.s32 %s19, %s26
      %s82 = sor.u32 %s80, %s81
      %p83 = scmp.eq.s32.totalorder %s82, 0
      %s85 = sadd.s32 %s84, 1
      %s86 = scalar_select %p83, %s84, %s85
      %p89 = pneg %p83
      %p90 = scmp.eq.s32.totalorder %s11, 3
      %p91 = por %p89, %p90
      %p92 = scmp.ne.s32.totalorder %s84, %s87
      %p93 = scmp.eq.s32.totalorder %s11, 0
      %p94 = por %p92, %p93
      %p95 = scmp.ne.s32.totalorder %s84, %s87
      %p96 = scmp.eq.s32.totalorder %s16, 3
      %p97 = por %p95, %p96
      %p98 = scmp.ne.s32.totalorder %s87, %s88
      %p99 = scmp.eq.s32.totalorder %s16, 0
      %p100 = por %p98, %p99
      %p101 = scmp.ne.s32.totalorder %s87, %s88
      %p102 = scmp.eq.s32.totalorder %s17, 3
      %p103 = por %p101, %p102
      %p105 = scmp.ne.s32.totalorder %s88, %s104
      %p106 = scmp.eq.s32.totalorder %s17, 0
      %p107 = por %p105, %p106
      %p108 = scmp.le.s32.totalorder 1, %s11
      %p109 = scmp.lt.s32.totalorder %s11, 5
      %p110 = pnand %p108, %p109
      %p111 = pneg %p110
      // Predicated region
      $region9: #{tpu_custom_call.1} parent=5 // pred_check
        _
      $region10: #{tpu_custom_call.1} parent=5 // pred_check_branch
        %113 = sbr.rel (%p110) target = $region12
      $region11: #{tpu_custom_call.1} parent=5 // pred_region
        %s114 = ssub.s32 %s11, 1
        // Predicated region
        $region13: #{tpu_custom_call.1} parent=11 // pred_check
          %p115 = pneg %p72
        $region14: #{tpu_custom_call.1} parent=11 // pred_check_branch
          %117 = sbr.rel (%p115) target = $region16
        $region15: #{tpu_custom_call.1} parent=11 // pred_region
          _
        $region16: #{tpu_custom_call.1} parent=11 // pred_fallthru
          _
      $region12: #{tpu_custom_call.1} parent=5 // pred_fallthru
        _
      %p118 = scmp.lt.s32.totalorder %s11, 4
      // Predicated region
      $region17: #{tpu_custom_call.1} parent=5 // pred_check
        %p119 = pneg %p118
      $region18: #{tpu_custom_call.1} parent=5 // pred_check_branch
        %121 = sbr.rel (%p119) target = $region20
      $region19: #{tpu_custom_call.1} parent=5 // pred_region
        // Predicated region
        $region21: #{tpu_custom_call.1} parent=19 // pred_check
          %p122 = pneg %p45
        $region22: #{tpu_custom_call.1} parent=19 // pred_check_branch
          %124 = sbr.rel (%p122) target = $region24
        $region23: #{tpu_custom_call.1} parent=19 // pred_region
          %p125 = scmp.lt.s32.totalorder %s18, 1
          %s126 = scalar_select %p125, %s18, 1
          %p127 = scmp.lt.s32.totalorder %s19, 1
          %s128 = scalar_select %p127, %s19, 1
          %s129 = smul.addr %s126, 2
          %s130 = sadd.s32 %s128, %s129
          %s131 = smul.addr %s130, 2
          %s132 = scalar_lea.vmem %s0, %s131
        $region24: #{tpu_custom_call.1} parent=19 // pred_fallthru
          _
      $region20: #{tpu_custom_call.1} parent=5 // pred_fallthru
        _
      %p133 = scmp.le.s32.totalorder 1, %s11
      %p134 = scmp.lt.s32.totalorder %s11, 5
      %p135 = pnand %p133, %p134
      %p136 = pneg %p135
      // Predicated region
      $region25: #{tpu_custom_call.1} parent=5 // pred_check
        _
      $region26: #{tpu_custom_call.1} parent=5 // pred_check_branch
        %138 = sbr.rel (%p135) target = $region28
      $region27: #{tpu_custom_call.1} parent=5 // pred_region
        %s139 = ssub.s32 %s11, 1
        %p140 = scmp.lt.s32.totalorder %s20, 1
        %s141 = scalar_select %p140, %s20, 1
        %p142 = scmp.lt.s32.totalorder %s21, 1
        %s143 = scalar_select %p142, %s21, 1
        %s144 = smul.addr %s141, 2
        %s145 = sadd.s32 %s143, %s144
        %s146 = smul.addr %s145, 2
        %s147 = scalar_lea.vmem %s0, %s146
        %p148 = pneg %p51
        %p149 = pneg %p48
        %p150 = pneg %p72
        %p151 = pneg %p69
        %p152 = pneg %p100
        %p153 = pneg %p97
        %s154 = sand.u32 %s87, 1
        %s155 = scalar_lea.sflag [#allocation3], %s154
        %s156 = sand.u32 %s87, 1
        %s157 = smul.addr %s156, 128
        %s158 = scalar_lea.vmem [#allocation2], %s157
        %p159 = scmp.lt.s32.totalorder %s20, 1
        %s160 = scalar_select %p159, %s20, 1
        %p161 = scmp.lt.s32.totalorder %s21, 1
        %s162 = scalar_select %p161, %s21, 1
        %s163 = smul.addr %s160, 2
        %s164 = sadd.s32 %s162, %s163
        %s165 = smul.addr %s164, 2
        %s166 = scalar_lea.vmem %s0, %s165
        %v167 = vld [vmem:[%s166] sm:$0x1]
        %v168 = vld [vmem:[%s166 + $0x1] sm:$0x1]
        %v169 = vld [vmem:[%s1] sm:$0xff]
        %v170 = vld [vmem:[%s1 + $0x8] sm:$0xff]
        %v171 = vld [vmem:[%s1 + $0x10] sm:$0xff]
        %v172 = vld [vmem:[%s1 + $0x18] sm:$0xff]
        %v173 = vld [vmem:[%s1 + $0x20] sm:$0xff]
        %v174 = vld [vmem:[%s1 + $0x28] sm:$0xff]
        %v175 = vld [vmem:[%s1 + $0x30] sm:$0xff]
        %v176 = vld [vmem:[%s1 + $0x38] sm:$0xff]
        %s177 = scalar_lea.vmem %s1, 64
        %v178 = vld [vmem:[%s177] sm:$0xff]
        %v179 = vld [vmem:[%s177 + $0x8] sm:$0xff]
        %v180 = vld [vmem:[%s177 + $0x10] sm:$0xff]
        %v181 = vld [vmem:[%s177 + $0x18] sm:$0xff]
        %v182 = vld [vmem:[%s177 + $0x20] sm:$0xff]
        %v183 = vld [vmem:[%s177 + $0x28] sm:$0xff]
        %v184 = vld [vmem:[%s177 + $0x30] sm:$0xff]
        %v185 = vld [vmem:[%s177 + $0x38] sm:$0xff]
        %v186 = vlaneseq
        %v187 = vshrl.u32 %v186, 7
        %v188 = vsub.s32 0, %v187
        %v189 = vrot.slane %v167, %v188
        %191 = vset.pattern.permute.xlu0 0
        %192 = vperm.xlu0 %191, %v169
        %v193 = vpop.permute.xlu0 %192
        %196 = vset.pattern.permute.xlu0 0
        %197 = vperm.xlu0 %196, %v170
        %v198 = vpop.permute.xlu0 %197
        %201 = vset.pattern.permute.xlu0 0
        %202 = vperm.xlu0 %201, %v171
        %v203 = vpop.permute.xlu0 %202
        %206 = vset.pattern.permute.xlu0 0
        %207 = vperm.xlu0 %206, %v172
        %v208 = vpop.permute.xlu0 %207
        %211 = vset.pattern.permute.xlu0 0
        %212 = vperm.xlu0 %211, %v173
        %v213 = vpop.permute.xlu0 %212
        %216 = vset.pattern.permute.xlu0 0
        %217 = vperm.xlu0 %216, %v174
        %v218 = vpop.permute.xlu0 %217
        %221 = vset.pattern.permute.xlu0 0
        %222 = vperm.xlu0 %221, %v175
        %v223 = vpop.permute.xlu0 %222
        %226 = vset.pattern.permute.xlu0 0
        %227 = vperm.xlu0 %226, %v176
        %v228 = vpop.permute.xlu0 %227
        %v230 = vmul.f32 %v189, %v193
        %v231 = vmul.f32 %v189, %v198
        %v232 = vmul.f32 %v189, %v203
        %v233 = vmul.f32 %v189, %v208
        %v234 = vmul.f32 %v189, %v213
        %v235 = vmul.f32 %v189, %v218
        %v236 = vmul.f32 %v189, %v223
        %v237 = vmul.f32 %v189, %v228
        %239 = vset.pattern.permute.xlu0 0
        %240 = vperm.xlu0 %239, %v178
        %v241 = vpop.permute.xlu0 %240
        %244 = vset.pattern.permute.xlu0 0
        %245 = vperm.xlu0 %244, %v179
        %v246 = vpop.permute.xlu0 %245
        %249 = vset.pattern.permute.xlu0 0
        %250 = vperm.xlu0 %249, %v180
        %v251 = vpop.permute.xlu0 %250
        %254 = vset.pattern.permute.xlu0 0
        %255 = vperm.xlu0 %254, %v181
        %v256 = vpop.permute.xlu0 %255
        %259 = vset.pattern.permute.xlu0 0
        %260 = vperm.xlu0 %259, %v182
        %v261 = vpop.permute.xlu0 %260
        %264 = vset.pattern.permute.xlu0 0
        %265 = vperm.xlu0 %264, %v183
        %v266 = vpop.permute.xlu0 %265
        %269 = vset.pattern.permute.xlu0 0
        %270 = vperm.xlu0 %269, %v184
        %v271 = vpop.permute.xlu0 %270
        %274 = vset.pattern.permute.xlu0 0
        %275 = vperm.xlu0 %274, %v185
        %v276 = vpop.permute.xlu0 %275
        %v278 = vadd.f32 %v230, %v241
        %v279 = vadd.f32 %v231, %v246
        %v280 = vadd.f32 %v232, %v251
        %v281 = vadd.f32 %v233, %v256
        %v282 = vadd.f32 %v234, %v261
        %v283 = vadd.f32 %v235, %v266
        %v284 = vadd.f32 %v236, %v271
        %v285 = vadd.f32 %v237, %v276
        %v286 = vmul.f32 %v278, 0.31830987
        %v287 = vmul.f32 %v279, 0.31830987
        %v288 = vmul.f32 %v280, 0.31830987
        %v289 = vmul.f32 %v281, 0.31830987
        %v290 = vmul.f32 %v282, 0.31830987
        %v291 = vmul.f32 %v283, 0.31830987
        %v292 = vmul.f32 %v284, 0.31830987
        %v293 = vmul.f32 %v285, 0.31830987
        %v294 = vadd.f32 %v286, 0.5
        %v295 = vadd.f32 %v287, 0.5
        %v296 = vadd.f32 %v288, 0.5
        %v297 = vadd.f32 %v289, 0.5
        %v298 = vadd.f32 %v290, 0.5
        %v299 = vadd.f32 %v291, 0.5
        %v300 = vadd.f32 %v292, 0.5
        %v301 = vadd.f32 %v293, 0.5
        %v302 = vfloor.f32 %v294
        %v303 = vfloor.f32 %v295
        %v304 = vfloor.f32 %v296
        %v305 = vfloor.f32 %v297
        %v306 = vfloor.f32 %v298
        %v307 = vfloor.f32 %v299
        %v308 = vfloor.f32 %v300
        %v309 = vfloor.f32 %v301
        %v310 = vmul.f32 %v302, 3.140625
        %v311 = vmul.f32 %v303, 3.140625
        %v312 = vmul.f32 %v304, 3.140625
        %v313 = vmul.f32 %v305, 3.140625
        %v314 = vmul.f32 %v306, 3.140625
        %v315 = vmul.f32 %v307, 3.140625
        %v316 = vmul.f32 %v308, 3.140625
        %v317 = vmul.f32 %v309, 3.140625
        %v318 = vsub.f32 %v278, %v310
        %v319 = vsub.f32 %v279, %v311
        %v320 = vsub.f32 %v280, %v312
        %v321 = vsub.f32 %v281, %v313
        %v322 = vsub.f32 %v282, %v314
        %v323 = vsub.f32 %v283, %v315
        %v324 = vsub.f32 %v284, %v316
        %v325 = vsub.f32 %v285, %v317
        %v326 = vmul.f32 %v302, 0.0009676536
        %v327 = vmul.f32 %v303, 0.0009676536
        %v328 = vmul.f32 %v304, 0.0009676536
        %v329 = vmul.f32 %v305, 0.0009676536
        %v330 = vmul.f32 %v306, 0.0009676536
        %v331 = vmul.f32 %v307, 0.0009676536
        %v332 = vmul.f32 %v308, 0.0009676536
        %v333 = vmul.f32 %v309, 0.0009676536
        %v334 = vsub.f32 %v318, %v326
        %v335 = vsub.f32 %v319, %v327
        %v336 = vsub.f32 %v320, %v328
        %v337 = vsub.f32 %v321, %v329
        %v338 = vsub.f32 %v322, %v330
        %v339 = vsub.f32 %v323, %v331
        %v340 = vsub.f32 %v324, %v332
        %v341 = vsub.f32 %v325, %v333
        %v342 = vmul.f32 %v302, 0.5
        %v343 = vmul.f32 %v303, 0.5
        %v344 = vmul.f32 %v304, 0.5
        %v345 = vmul.f32 %v305, 0.5
        %v346 = vmul.f32 %v306, 0.5
        %v347 = vmul.f32 %v307, 0.5
        %v348 = vmul.f32 %v308, 0.5
        %v349 = vmul.f32 %v309, 0.5
        %v350 = vfloor.f32 %v342
        %v351 = vfloor.f32 %v343
        %v352 = vfloor.f32 %v344
        %v353 = vfloor.f32 %v345
        %v354 = vfloor.f32 %v346
        %v355 = vfloor.f32 %v347
        %v356 = vfloor.f32 %v348
        %v357 = vfloor.f32 %v349
        %v358 = vmul.f32 %v350, 2.0
        %v359 = vmul.f32 %v351, 2.0
        %v360 = vmul.f32 %v352, 2.0
        %v361 = vmul.f32 %v353, 2.0
        %v362 = vmul.f32 %v354, 2.0
        %v363 = vmul.f32 %v355, 2.0
        %v364 = vmul.f32 %v356, 2.0
        %v365 = vmul.f32 %v357, 2.0
        %v366 = vsub.f32 %v302, %v358
        %v367 = vsub.f32 %v303, %v359
        %v368 = vsub.f32 %v304, %v360
        %v369 = vsub.f32 %v305, %v361
        %v370 = vsub.f32 %v306, %v362
        %v371 = vsub.f32 %v307, %v363
        %v372 = vsub.f32 %v308, %v364
        %v373 = vsub.f32 %v309, %v365
        %v374 = vmul.f32 %v366, 2.0
        %v375 = vmul.f32 %v367, 2.0
        %v376 = vmul.f32 %v368, 2.0
        %v377 = vmul.f32 %v369, 2.0
        %v378 = vmul.f32 %v370, 2.0
        %v379 = vmul.f32 %v371, 2.0
        %v380 = vmul.f32 %v372, 2.0
        %v381 = vmul.f32 %v373, 2.0
        %v382 = vsub.f32 1.0, %v374
        %v383 = vsub.f32 1.0, %v375
        %v384 = vsub.f32 1.0, %v376
        %v385 = vsub.f32 1.0, %v377
        %v386 = vsub.f32 1.0, %v378
        %v387 = vsub.f32 1.0, %v379
        %v388 = vsub.f32 1.0, %v380
        %v389 = vsub.f32 1.0, %v381
        %v390 = vmul.f32 %v334, %v382
        %v391 = vmul.f32 %v335, %v383
        %v392 = vmul.f32 %v336, %v384
        %v393 = vmul.f32 %v337, %v385
        %v394 = vmul.f32 %v338, %v386
        %v395 = vmul.f32 %v339, %v387
        %v396 = vmul.f32 %v340, %v388
        %v397 = vmul.f32 %v341, %v389
        %v398 = vmul.f32 %v390, %v390
        %v399 = vmul.f32 %v391, %v391
        %v400 = vmul.f32 %v392, %v392
        %v401 = vmul.f32 %v393, %v393
        %v402 = vmul.f32 %v394, %v394
        %v403 = vmul.f32 %v395, %v395
        %v404 = vmul.f32 %v396, %v396
        %v405 = vmul.f32 %v397, %v397
        %v406 = vmul.f32 %v398, 2.608316e-06
        %v407 = vmul.f32 %v399, 2.608316e-06
        %v408 = vmul.f32 %v400, 2.608316e-06
        %v409 = vmul.f32 %v401, 2.608316e-06
        %v410 = vmul.f32 %v402, 2.608316e-06
        %v411 = vmul.f32 %v403, 2.608316e-06
        %v412 = vmul.f32 %v404, 2.608316e-06
        %v413 = vmul.f32 %v405, 2.608316e-06
        %v414 = vadd.f32 %v406, -0.0001981069
        %v415 = vadd.f32 %v407, -0.0001981069
        %v416 = vadd.f32 %v408, -0.0001981069
        %v417 = vadd.f32 %v409, -0.0001981069
        %v418 = vadd.f32 %v410, -0.0001981069
        %v419 = vadd.f32 %v411, -0.0001981069
        %v420 = vadd.f32 %v412, -0.0001981069
        %v421 = vadd.f32 %v413, -0.0001981069
        %v422 = vmul.f32 %v414, %v398
        %v423 = vmul.f32 %v415, %v399
        %v424 = vmul.f32 %v416, %v400
        %v425 = vmul.f32 %v417, %v401
        %v426 = vmul.f32 %v418, %v402
        %v427 = vmul.f32 %v419, %v403
        %v428 = vmul.f32 %v420, %v404
        %v429 = vmul.f32 %v421, %v405
        %v430 = vadd.f32 %v422, 0.008333079
        %v431 = vadd.f32 %v423, 0.008333079
        %v432 = vadd.f32 %v424, 0.008333079
        %v433 = vadd.f32 %v425, 0.008333079
        %v434 = vadd.f32 %v426, 0.008333079
        %v435 = vadd.f32 %v427, 0.008333079
        %v436 = vadd.f32 %v428, 0.008333079
        %v437 = vadd.f32 %v429, 0.008333079
        %v438 = vmul.f32 %v430, %v398
        %v439 = vmul.f32 %v431, %v399
        %v440 = vmul.f32 %v432, %v400
        %v441 = vmul.f32 %v433, %v401
        %v442 = vmul.f32 %v434, %v402
        %v443 = vmul.f32 %v435, %v403
        %v444 = vmul.f32 %v436, %v404
        %v445 = vmul.f32 %v437, %v405
        %v446 = vadd.f32 %v438, -0.1666666
        %v447 = vadd.f32 %v439, -0.1666666
        %v448 = vadd.f32 %v440, -0.1666666
        %v449 = vadd.f32 %v441, -0.1666666
        %v450 = vadd.f32 %v442, -0.1666666
        %v451 = vadd.f32 %v443, -0.1666666
        %v452 = vadd.f32 %v444, -0.1666666
        %v453 = vadd.f32 %v445, -0.1666666
        %v454 = vmul.f32 %v398, %v446
        %v455 = vmul.f32 %v399, %v447
        %v456 = vmul.f32 %v400, %v448
        %v457 = vmul.f32 %v401, %v449
        %v458 = vmul.f32 %v402, %v450
        %v459 = vmul.f32 %v403, %v451
        %v460 = vmul.f32 %v404, %v452
        %v461 = vmul.f32 %v405, %v453
        %v462 = vmul.f32 %v390, %v454
        %v463 = vmul.f32 %v391, %v455
        %v464 = vmul.f32 %v392, %v456
        %v465 = vmul.f32 %v393, %v457
        %v466 = vmul.f32 %v394, %v458
        %v467 = vmul.f32 %v395, %v459
        %v468 = vmul.f32 %v396, %v460
        %v469 = vmul.f32 %v397, %v461
        %v470 = vadd.f32 %v390, %v462
        %v471 = vadd.f32 %v391, %v463
        %v472 = vadd.f32 %v392, %v464
        %v473 = vadd.f32 %v393, %v465
        %v474 = vadd.f32 %v394, %v466
        %v475 = vadd.f32 %v395, %v467
        %v476 = vadd.f32 %v396, %v468
        %v477 = vadd.f32 %v397, %v469
        %478 = vst [vmem:[%s158] sm:$0xff] %v470
        %479 = vst [vmem:[%s158 + $0x8] sm:$0xff] %v471
        %480 = vst [vmem:[%s158 + $0x10] sm:$0xff] %v472
        %481 = vst [vmem:[%s158 + $0x18] sm:$0xff] %v473
        %482 = vst [vmem:[%s158 + $0x20] sm:$0xff] %v474
        %483 = vst [vmem:[%s158 + $0x28] sm:$0xff] %v475
        %484 = vst [vmem:[%s158 + $0x30] sm:$0xff] %v476
        %485 = vst [vmem:[%s158 + $0x38] sm:$0xff] %v477
        %v486 = vlaneseq
        %v487 = vshrl.u32 %v486, 7
        %v488 = vsub.s32 0, %v487
        %v489 = vrot.slane %v168, %v488
        %v490 = vmul.f32 %v489, %v193
        %v491 = vmul.f32 %v489, %v198
        %v492 = vmul.f32 %v489, %v203
        %v493 = vmul.f32 %v489, %v208
        %v494 = vmul.f32 %v489, %v213
        %v495 = vmul.f32 %v489, %v218
        %v496 = vmul.f32 %v489, %v223
        %v497 = vmul.f32 %v489, %v228
        %v498 = vadd.f32 %v490, %v241
        %v499 = vadd.f32 %v491, %v246
        %v500 = vadd.f32 %v492, %v251
        %v501 = vadd.f32 %v493, %v256
        %v502 = vadd.f32 %v494, %v261
        %v503 = vadd.f32 %v495, %v266
        %v504 = vadd.f32 %v496, %v271
        %v505 = vadd.f32 %v497, %v276
        %v506 = vmul.f32 %v498, 0.31830987
        %v507 = vmul.f32 %v499, 0.31830987
        %v508 = vmul.f32 %v500, 0.31830987
        %v509 = vmul.f32 %v501, 0.31830987
        %v510 = vmul.f32 %v502, 0.31830987
        %v511 = vmul.f32 %v503, 0.31830987
        %v512 = vmul.f32 %v504, 0.31830987
        %v513 = vmul.f32 %v505, 0.31830987
        %v514 = vadd.f32 %v506, 0.5
        %v515 = vadd.f32 %v507, 0.5
        %v516 = vadd.f32 %v508, 0.5
        %v517 = vadd.f32 %v509, 0.5
        %v518 = vadd.f32 %v510, 0.5
        %v519 = vadd.f32 %v511, 0.5
        %v520 = vadd.f32 %v512, 0.5
        %v521 = vadd.f32 %v513, 0.5
        %v522 = vfloor.f32 %v514
        %v523 = vfloor.f32 %v515
        %v524 = vfloor.f32 %v516
        %v525 = vfloor.f32 %v517
        %v526 = vfloor.f32 %v518
        %v527 = vfloor.f32 %v519
        %v528 = vfloor.f32 %v520
        %v529 = vfloor.f32 %v521
        %v530 = vmul.f32 %v522, 3.140625
        %v531 = vmul.f32 %v523, 3.140625
        %v532 = vmul.f32 %v524, 3.140625
        %v533 = vmul.f32 %v525, 3.140625
        %v534 = vmul.f32 %v526, 3.140625
        %v535 = vmul.f32 %v527, 3.140625
        %v536 = vmul.f32 %v528, 3.140625
        %v537 = vmul.f32 %v529, 3.140625
        %v538 = vsub.f32 %v498, %v530
        %v539 = vsub.f32 %v499, %v531
        %v540 = vsub.f32 %v500, %v532
        %v541 = vsub.f32 %v501, %v533
        %v542 = vsub.f32 %v502, %v534
        %v543 = vsub.f32 %v503, %v535
        %v544 = vsub.f32 %v504, %v536
        %v545 = vsub.f32 %v505, %v537
        %v546 = vmul.f32 %v522, 0.0009676536
        %v547 = vmul.f32 %v523, 0.0009676536
        %v548 = vmul.f32 %v524, 0.0009676536
        %v549 = vmul.f32 %v525, 0.0009676536
        %v550 = vmul.f32 %v526, 0.0009676536
        %v551 = vmul.f32 %v527, 0.0009676536
        %v552 = vmul.f32 %v528, 0.0009676536
        %v553 = vmul.f32 %v529, 0.0009676536
        %v554 = vsub.f32 %v538, %v546
        %v555 = vsub.f32 %v539, %v547
        %v556 = vsub.f32 %v540, %v548
        %v557 = vsub.f32 %v541, %v549
        %v558 = vsub.f32 %v542, %v550
        %v559 = vsub.f32 %v543, %v551
        %v560 = vsub.f32 %v544, %v552
        %v561 = vsub.f32 %v545, %v553
        %v562 = vmul.f32 %v522, 0.5
        %v563 = vmul.f32 %v523, 0.5
        %v564 = vmul.f32 %v524, 0.5
        %v565 = vmul.f32 %v525, 0.5
        %v566 = vmul.f32 %v526, 0.5
        %v567 = vmul.f32 %v527, 0.5
        %v568 = vmul.f32 %v528, 0.5
        %v569 = vmul.f32 %v529, 0.5
        %v570 = vfloor.f32 %v562
        %v571 = vfloor.f32 %v563
        %v572 = vfloor.f32 %v564
        %v573 = vfloor.f32 %v565
        %v574 = vfloor.f32 %v566
        %v575 = vfloor.f32 %v567
        %v576 = vfloor.f32 %v568
        %v577 = vfloor.f32 %v569
        %v578 = vmul.f32 %v570, 2.0
        %v579 = vmul.f32 %v571, 2.0
        %v580 = vmul.f32 %v572, 2.0
        %v581 = vmul.f32 %v573, 2.0
        %v582 = vmul.f32 %v574, 2.0
        %v583 = vmul.f32 %v575, 2.0
        %v584 = vmul.f32 %v576, 2.0
        %v585 = vmul.f32 %v577, 2.0
        %v586 = vsub.f32 %v522, %v578
        %v587 = vsub.f32 %v523, %v579
        %v588 = vsub.f32 %v524, %v580
        %v589 = vsub.f32 %v525, %v581
        %v590 = vsub.f32 %v526, %v582
        %v591 = vsub.f32 %v527, %v583
        %v592 = vsub.f32 %v528, %v584
        %v593 = vsub.f32 %v529, %v585
        %v594 = vmul.f32 %v586, 2.0
        %v595 = vmul.f32 %v587, 2.0
        %v596 = vmul.f32 %v588, 2.0
        %v597 = vmul.f32 %v589, 2.0
        %v598 = vmul.f32 %v590, 2.0
        %v599 = vmul.f32 %v591, 2.0
        %v600 = vmul.f32 %v592, 2.0
        %v601 = vmul.f32 %v593, 2.0
        %v602 = vsub.f32 1.0, %v594
        %v603 = vsub.f32 1.0, %v595
        %v604 = vsub.f32 1.0, %v596
        %v605 = vsub.f32 1.0, %v597
        %v606 = vsub.f32 1.0, %v598
        %v607 = vsub.f32 1.0, %v599
        %v608 = vsub.f32 1.0, %v600
        %v609 = vsub.f32 1.0, %v601
        %v610 = vmul.f32 %v554, %v602
        %v611 = vmul.f32 %v555, %v603
        %v612 = vmul.f32 %v556, %v604
        %v613 = vmul.f32 %v557, %v605
        %v614 = vmul.f32 %v558, %v606
        %v615 = vmul.f32 %v559, %v607
        %v616 = vmul.f32 %v560, %v608
        %v617 = vmul.f32 %v561, %v609
        %v618 = vmul.f32 %v610, %v610
        %v619 = vmul.f32 %v611, %v611
        %v620 = vmul.f32 %v612, %v612
        %v621 = vmul.f32 %v613, %v613
        %v622 = vmul.f32 %v614, %v614
        %v623 = vmul.f32 %v615, %v615
        %v624 = vmul.f32 %v616, %v616
        %v625 = vmul.f32 %v617, %v617
        %v626 = vmul.f32 %v618, 2.608316e-06
        %v627 = vmul.f32 %v619, 2.608316e-06
        %v628 = vmul.f32 %v620, 2.608316e-06
        %v629 = vmul.f32 %v621, 2.608316e-06
        %v630 = vmul.f32 %v622, 2.608316e-06
        %v631 = vmul.f32 %v623, 2.608316e-06
        %v632 = vmul.f32 %v624, 2.608316e-06
        %v633 = vmul.f32 %v625, 2.608316e-06
        %v634 = vadd.f32 %v626, -0.0001981069
        %v635 = vadd.f32 %v627, -0.0001981069
        %v636 = vadd.f32 %v628, -0.0001981069
        %v637 = vadd.f32 %v629, -0.0001981069
        %v638 = vadd.f32 %v630, -0.0001981069
        %v639 = vadd.f32 %v631, -0.0001981069
        %v640 = vadd.f32 %v632, -0.0001981069
        %v641 = vadd.f32 %v633, -0.0001981069
        %v642 = vmul.f32 %v634, %v618
        %v643 = vmul.f32 %v635, %v619
        %v644 = vmul.f32 %v636, %v620
        %v645 = vmul.f32 %v637, %v621
        %v646 = vmul.f32 %v638, %v622
        %v647 = vmul.f32 %v639, %v623
        %v648 = vmul.f32 %v640, %v624
        %v649 = vmul.f32 %v641, %v625
        %v650 = vadd.f32 %v642, 0.008333079
        %v651 = vadd.f32 %v643, 0.008333079
        %v652 = vadd.f32 %v644, 0.008333079
        %v653 = vadd.f32 %v645, 0.008333079
        %v654 = vadd.f32 %v646, 0.008333079
        %v655 = vadd.f32 %v647, 0.008333079
        %v656 = vadd.f32 %v648, 0.008333079
        %v657 = vadd.f32 %v649, 0.008333079
        %v658 = vmul.f32 %v650, %v618
        %v659 = vmul.f32 %v651, %v619
        %v660 = vmul.f32 %v652, %v620
        %v661 = vmul.f32 %v653, %v621
        %v662 = vmul.f32 %v654, %v622
        %v663 = vmul.f32 %v655, %v623
        %v664 = vmul.f32 %v656, %v624
        %v665 = vmul.f32 %v657, %v625
        %v666 = vadd.f32 %v658, -0.1666666
        %v667 = vadd.f32 %v659, -0.1666666
        %v668 = vadd.f32 %v660, -0.1666666
        %v669 = vadd.f32 %v661, -0.1666666
        %v670 = vadd.f32 %v662, -0.1666666
        %v671 = vadd.f32 %v663, -0.1666666
        %v672 = vadd.f32 %v664, -0.1666666
        %v673 = vadd.f32 %v665, -0.1666666
        %v674 = vmul.f32 %v618, %v666
        %v675 = vmul.f32 %v619, %v667
        %v676 = vmul.f32 %v620, %v668
        %v677 = vmul.f32 %v621, %v669
        %v678 = vmul.f32 %v622, %v670
        %v679 = vmul.f32 %v623, %v671
        %v680 = vmul.f32 %v624, %v672
        %v681 = vmul.f32 %v625, %v673
        %v682 = vmul.f32 %v610, %v674
        %v683 = vmul.f32 %v611, %v675
        %v684 = vmul.f32 %v612, %v676
        %v685 = vmul.f32 %v613, %v677
        %v686 = vmul.f32 %v614, %v678
        %v687 = vmul.f32 %v615, %v679
        %v688 = vmul.f32 %v616, %v680
        %v689 = vmul.f32 %v617, %v681
        %v690 = vadd.f32 %v610, %v682
        %v691 = vadd.f32 %v611, %v683
        %v692 = vadd.f32 %v612, %v684
        %v693 = vadd.f32 %v613, %v685
        %v694 = vadd.f32 %v614, %v686
        %v695 = vadd.f32 %v615, %v687
        %v696 = vadd.f32 %v616, %v688
        %v697 = vadd.f32 %v617, %v689
        %698 = vst [vmem:[%s158 + $0x40] sm:$0xff] %v690
        %699 = vst [vmem:[%s158 + $0x48] sm:$0xff] %v691
        %700 = vst [vmem:[%s158 + $0x50] sm:$0xff] %v692
        %701 = vst [vmem:[%s158 + $0x58] sm:$0xff] %v693
        %702 = vst [vmem:[%s158 + $0x60] sm:$0xff] %v694
        %703 = vst [vmem:[%s158 + $0x68] sm:$0xff] %v695
        %704 = vst [vmem:[%s158 + $0x70] sm:$0xff] %v696
        %705 = vst [vmem:[%s158 + $0x78] sm:$0xff] %v697
        %s706 = sand.u32 %s87, 1
        %s707 = scalar_lea.sflag [#allocation3], %s706
        %s708 = sand.u32 %s87, 1
        %s709 = smul.addr %s708, 128
        %s710 = scalar_lea.vmem [#allocation2], %s709
        // Predicated region
        $region29: #{tpu_custom_call.1} parent=27 // pred_check
          %p711 = pneg %p97
        $region30: #{tpu_custom_call.1} parent=27 // pred_check_branch
          %713 = sbr.rel (%p711) target = $region32
        $region31: #{tpu_custom_call.1} parent=27 // pred_region
          %s715 = ssub.s32 2048, 2048
          %716 = vsyncadd %s707, %s715
          %s717 = smul.addr %s20, 32
          %s718 = sadd.s32 %s21, %s717
          %s719 = smul.addr %s718, 128
          %s720 = scalar_lea.hbm %s2, %s719
          %s721 = sshll.u32 %s710, 4
          %s722 = int_to_ptr.vmem [resolvable:$true] %s721
          %727 = dma.vmem_to_hbm [thread:$0]  %s722, 2048, %s720, %s707, 128, 256, 8
        $region32: #{tpu_custom_call.1} parent=27 // pred_fallthru
          _
      $region28: #{tpu_custom_call.1} parent=5 // pred_fallthru
        _
      %p728 = scmp.le.s32.totalorder 2, %s11
      // Predicated region
      $region33: #{tpu_custom_call.1} parent=5 // pred_check
        %p729 = pneg %p728
      $region34: #{tpu_custom_call.1} parent=5 // pred_check_branch
        %731 = sbr.rel (%p729) target = $region36
      $region35: #{tpu_custom_call.1} parent=5 // pred_region
        %s732 = ssub.s32 %s11, 2
        // Predicated region
        $region37: #{tpu_custom_call.1} parent=35 // pred_check
          %p733 = pneg %p103
        $region38: #{tpu_custom_call.1} parent=35 // pred_check_branch
          %735 = sbr.rel (%p733) target = $region40
        $region39: #{tpu_custom_call.1} parent=35 // pred_region
          %s736 = sand.u32 %s88, 1
          %s737 = scalar_lea.sflag [#allocation3], %s736
          %s738 = sand.u32 %s88, 1
          %s739 = smul.addr %s738, 128
          %s740 = scalar_lea.vmem [#allocation2], %s739
          %741 = dma.done %s737, 2048
        $region40: #{tpu_custom_call.1} parent=35 // pred_fallthru
          _
      $region36: #{tpu_custom_call.1} parent=5 // pred_fallthru
        _
    $region6: #{tpu_custom_call.1} parent=1 // loop_footer
      %s15 = sadd.s32 1, %s11
    $region7: #{tpu_custom_call.1} parent=1 // loop_footer_branch
      %10 = sbr.rel target = $region3
    $region8: #{tpu_custom_call.1} parent=1 // loop_exit
      _
    %742 = vsyncpa [#allocation3], 1
    %s743 = scalar_lea.sflag [#allocation3], 1
    %744 = vsyncpa %s743, 1

</llo_original>
